<compile_context>
chip_gen: v6e
topology: v6e:2x2x1
jax: 0.10.0
libtpu: 0.0.40
codegen_flags: <defaults>
</compile_context>

<pallas_src>
import functools

import jax
import jax.numpy as jnp
from jax.experimental import pallas as pl
from jax.experimental.pallas import tpu as pltpu


THRESHOLD = 0.15          # TwoStageClassifier.threshold
NUM_MULTI_CLASSES = 53


def _softplus(x):
    # Numerically stable log(1 + exp(x)); exp/log land in the EUP slot.
    return jnp.maximum(x, 0.0) + jnp.log(1.0 + jnp.exp(-jnp.abs(x)))


# ----------------------------- flag == 'binary' -----------------------------
def _binary_kernel(ctx_t_ref, label_ref, loss_ref, out_ref):
    """Binary CE + argmax, fully lane-dense.

    ctx_t_ref : (2, B)  binary logits, transposed (B on the lane axis)
    label_ref : (1, B)  int32 labels
    loss_ref  : (1,)    f32 SMEM  (mean CE loss)
    out_ref   : (1, B)  int32     (argmax over the 2 logits)
    """
    ctx = ctx_t_ref[...].astype(jnp.float32)        # (2, B), cast in-kernel
    label = label_ref[...]                          # (1, B)
    B = ctx.shape[1]

    d = ctx[1:2, :] - ctx[0:1, :]                   # (1, B) logit difference
    # binary_label = where(label != 0, 1, label); CE picks -log p[binary_label]
    #   -log p1 = softplus(-d), -log p0 = softplus(d)
    nll = jnp.where(label != 0, _softplus(-d), _softplus(d))
    loss_ref[0] = jnp.sum(nll) / jnp.float32(B)

    # torch.max tie-break (first max index): output 1 only if strictly greater.
    out_ref[...] = jnp.where(d > 0.0, jnp.int32(1), jnp.int32(0))


# ------------------------------ flag == 'multi' ------------------------------
def _multi_kernel(soc_ref, ctx_ref, label_ref, loss_ref, out_ref):
    """Gate rows by p(not-NA) >= threshold, masked CE over 53 classes, argmax.

    soc_ref   : (B, C)  multi-class logits (classes on the lane axis)
    ctx_ref   : (B, 2)  binary logits
    label_ref : (B, 1)  int32 labels
    loss_ref  : (1,)    f32 SMEM (masked-mean CE; 0 if no row passes the gate)
    out_ref   : (1, B)  f32 lane-dense output
    """
    soc = soc_ref[...].astype(jnp.float32)          # (B, C)
    ctx = ctx_ref[...].astype(jnp.float32)          # (B, 2)
    label = label_ref[...]                          # (B, 1)
    B, C = soc.shape

    # p(not NA) = softmax(ctx)[:, 1] == sigmoid(ctx1 - ctx0): no XLU reductions.
    d = ctx[:, 1:2] - ctx[:, 0:1]                   # (B, 1)
    p1 = 1.0 / (1.0 + jnp.exp(-d))                  # (B, 1)
    not_na = p1 >= THRESHOLD                        # (B, 1) bool

    # log-softmax over the class (lane) axis.
    soc_max = jnp.max(soc, axis=1, keepdims=True)   # (B, 1)
    shifted = soc - soc_max
    lse = jnp.log(jnp.sum(jnp.exp(shifted), axis=1, keepdims=True))
    logp = shifted - lse                            # (B, C)

    col = jax.lax.broadcasted_iota(jnp.int32, (B, C), 1)
    onehot = (col == label).astype(jnp.float32)                     # (B, C)
    logp_at_label = jnp.sum(onehot * logp, axis=1, keepdims=True)   # (B, 1)

    mask = not_na.astype(jnp.float32)
    count = jnp.sum(mask)
    masked_nll = -jnp.sum(mask * logp_at_label)
    # PyTorch keeps multi_loss == 0 when no row passes the gate.
    loss_ref[0] = jnp.where(count > 0.0,
                            masked_nll / jnp.maximum(count, 1.0),
                            jnp.float32(0.0))

    # First-max-index argmax over classes (torch semantics), as float,
    # masked to 0 for NA rows.
    is_max = soc == soc_max
    idx = jnp.where(is_max, col, jnp.int32(C))
    max_index = jnp.min(idx, axis=1, keepdims=True).astype(jnp.float32)   # (B,1)
    out_col = jnp.where(not_na, max_index, jnp.float32(0.0))              # (B,1)

    # Relayout (B,1) -> (1,B) via a masked reduction (safe to lower on tiny,
    # non-tile-aligned shapes) so the output store is lane-dense.
    rowsel = (jax.lax.broadcasted_iota(jnp.int32, (B, B), 0) ==
              jax.lax.broadcasted_iota(jnp.int32, (B, B), 1)).astype(jnp.float32)
    out_ref[...] = jnp.sum(out_col * rowsel, axis=0, keepdims=True)       # (1,B)


# --------------------------------- wrapper ----------------------------------
@functools.partial(jax.jit, static_argnames=("flag",))
def two_stage_forward(soc_bag_embedding, context_bag_embedding, label, flag):
    """Pallas implementation of TwoStageClassifier.forward, specialized on flag."""
    B = context_bag_embedding.shape[0]
    # TODO(synk): if the upstream ffn_* Linear producing these embeddings is
    # ever used, fuse it into this pallas_call so the embeddings never hit HBM.

    if flag == "binary":
        ctx_t = context_bag_embedding.T                      # (2, B) lane-dense
        label_row = label.reshape(1, B).astype(jnp.int32)    # (1, B)
        loss, out = pl.pallas_call(
            _binary_kernel,
            out_shape=(
                jax.ShapeDtypeStruct((1,), jnp.float32),     # CE loss (SMEM)
                jax.ShapeDtypeStruct((1, B), jnp.int32),     # argmax (lane-dense)
            ),
            in_specs=[
                pl.BlockSpec(memory_space=pltpu.MemorySpace.VMEM),
                pl.BlockSpec(memory_space=pltpu.MemorySpace.VMEM),
            ],
            out_specs=(
                pl.BlockSpec(memory_space=pltpu.MemorySpace.SMEM),
                pl.BlockSpec(memory_space=pltpu.MemorySpace.VMEM),
            ),
            cost_estimate=pl.CostEstimate(
                flops=10 * B, transcendentals=2 * B,
                bytes_accessed=(2 * B + B + B + 1) * 4),
        )(ctx_t, label_row)
        return loss[0], out[0]

    # flag == 'multi'
    C = soc_bag_embedding.shape[1]
    label_col = label.reshape(B, 1).astype(jnp.int32)        # (B, 1)
    loss, out = pl.pallas_call(
        _multi_kernel,
        out_shape=(
            jax.ShapeDtypeStruct((1,), jnp.float32),         # CE loss (SMEM)
            jax.ShapeDtypeStruct((1, B), jnp.float32),       # output (lane-dense)
        ),
        in_specs=[
            pl.BlockSpec(memory_space=pltpu.MemorySpace.VMEM),
            pl.BlockSpec(memory_space=pltpu.MemorySpace.VMEM),
            pl.BlockSpec(memory_space=pltpu.MemorySpace.VMEM),
        ],
        out_specs=(
            pl.BlockSpec(memory_space=pltpu.MemorySpace.SMEM),
            pl.BlockSpec(memory_space=pltpu.MemorySpace.VMEM),
        ),
        cost_estimate=pl.CostEstimate(
            flops=10 * B * C, transcendentals=B * C + 2 * B,
            bytes_accessed=(B * C + 2 * B + 2 * B + 1) * 4),
    )(soc_bag_embedding, context_bag_embedding, label_col)
    return loss[0], out[0]


# --------------------------- pure-JAX reference ------------------------------
def _reference_forward(soc, ctx, label, flag):
    """Pure-JAX reference of the PyTorch forward, for verification."""
    ctx_logp = jax.nn.log_softmax(ctx, axis=1)
    blabel = jnp.where(label != 0, 1, label)
    bin_loss = -jnp.mean(jnp.take_along_axis(ctx_logp, blabel[:, None], axis=1))
    bin_out = jnp.argmax(ctx, axis=1).astype(jnp.int32)
    if flag == "binary":
        return bin_loss, bin_out
    p1 = jax.nn.softmax(ctx, axis=1)[:, 1]
    not_na = p1 >= THRESHOLD
    soc_logp = jax.nn.log_softmax(soc, axis=1)
    nll = -jnp.take_along_axis(soc_logp, label[:, None], axis=1)[:, 0]
    cnt = jnp.sum(not_na.astype(jnp.float32))
    mloss = jnp.where(cnt > 0,
                      jnp.sum(jnp.where(not_na, nll, 0.0)) / jnp.maximum(cnt, 1.0),
                      0.0)
    mout = jnp.where(not_na, jnp.argmax(soc, axis=1).astype(jnp.float32), 0.0)
    return mloss, mout


if __name__ == "__main__":
    key = jax.random.PRNGKey(0)
    B, hidden_size, num_classes = 8, 32, NUM_MULTI_CLASSES

    k_soc, k_ctx, k_lab = jax.random.split(key, 3)
    # NOTE: ffn_multi / ffn_rel / ffn_binary params exist in __init__ but are
    # never used by forward(); the forward consumes the embeddings directly.
    soc_bag_embedding = jax.random.normal(k_soc, (B, num_classes), jnp.float32)
    context_bag_embedding = jax.random.normal(k_ctx, (B, 2), jnp.float32)
    label = jax.random.randint(k_lab, (B,), 0, num_classes, dtype=jnp.int32)

    # flag == 'binary'
    bin_loss, bin_out = two_stage_forward(
        soc_bag_embedding, context_bag_embedding, label, flag="binary")
    # flag == 'multi'
    multi_loss, multi_out = two_stage_forward(
        soc_bag_embedding, context_bag_embedding, label, flag="multi")

    jax.block_until_ready((bin_loss, bin_out, multi_loss, multi_out))

    # correctness check against a pure-JAX reference
    rb_loss, rb_out = _reference_forward(
        soc_bag_embedding, context_bag_embedding, label, "binary")
    rm_loss, rm_out = _reference_forward(
        soc_bag_embedding, context_bag_embedding, label, "multi")
    assert jnp.allclose(bin_loss, rb_loss, atol=1e-5)
    assert jnp.array_equal(bin_out, rb_out)
    assert jnp.allclose(multi_loss, rm_loss, atol=1e-5)
    assert jnp.allclose(multi_out, rm_out, atol=1e-6)

    print("KERNEL_OK")
</pallas_src>

<mosaic_0001>
module attributes {stable_mosaic.version = 11 : i64} {
  func.func @_binary_kernel(%arg0: memref<2x8xf32, #tpu.memory_space<vmem>>, %arg1: memref<1x8xi32, #tpu.memory_space<vmem>>, %arg2: memref<1xf32, #tpu.memory_space<smem>>, %arg3: memref<1x8xi32, #tpu.memory_space<vmem>>) attributes {dimension_semantics = [], scalar_prefetch = 0 : i64, scratch_operands = 0 : i64, tpu.core_type = #tpu.core_type<tc>} {
    %c0 = arith.constant 0 : index
    %c0_0 = arith.constant 0 : index
    %0 = vector.load %arg0[%c0, %c0_0] : memref<2x8xf32, #tpu.memory_space<vmem>>, vector<2x8xf32>
    %c0_1 = arith.constant 0 : index
    %c0_2 = arith.constant 0 : index
    %1 = vector.load %arg1[%c0_1, %c0_2] : memref<1x8xi32, #tpu.memory_space<vmem>>, vector<1x8xi32>
    %2 = vector.extract_strided_slice %0 {offsets = [1, 0], sizes = [1, 8], strides = [1, 1]} : vector<2x8xf32> to vector<1x8xf32>
    %3 = vector.extract_strided_slice %0 {offsets = [0, 0], sizes = [1, 8], strides = [1, 1]} : vector<2x8xf32> to vector<1x8xf32>
    %4 = arith.subf %2, %3 : vector<1x8xf32>
    %c0_i32 = arith.constant 0 : i32
    %5 = vector.broadcast %c0_i32 : i32 to vector<1x8xi32>
    %6 = arith.cmpi ne, %1, %5 : vector<1x8xi32>
    %cst = arith.constant 0.000000e+00 : f32
    %7 = vector.broadcast %cst : f32 to vector<1x8xf32>
    %8 = arith.subf %7, %4 : vector<1x8xf32>
    %cst_3 = arith.constant 0.000000e+00 : f32
    %9 = vector.broadcast %cst_3 : f32 to vector<1x8xf32>
    %10 = arith.maximumf %8, %9 : vector<1x8xf32>
    %11 = math.absf %8 : vector<1x8xf32>
    %cst_4 = arith.constant 0.000000e+00 : f32
    %12 = vector.broadcast %cst_4 : f32 to vector<1x8xf32>
    %13 = arith.subf %12, %11 : vector<1x8xf32>
    %14 = math.exp %13 : vector<1x8xf32>
    %cst_5 = arith.constant 1.000000e+00 : f32
    %15 = vector.broadcast %cst_5 : f32 to vector<1x8xf32>
    %16 = arith.addf %15, %14 : vector<1x8xf32>
    %17 = math.log %16 : vector<1x8xf32>
    %18 = arith.addf %10, %17 : vector<1x8xf32>
    %cst_6 = arith.constant 0.000000e+00 : f32
    %19 = vector.broadcast %cst_6 : f32 to vector<1x8xf32>
    %20 = arith.maximumf %4, %19 : vector<1x8xf32>
    %21 = math.absf %4 : vector<1x8xf32>
    %cst_7 = arith.constant 0.000000e+00 : f32
    %22 = vector.broadcast %cst_7 : f32 to vector<1x8xf32>
    %23 = arith.subf %22, %21 : vector<1x8xf32>
    %24 = math.exp %23 : vector<1x8xf32>
    %cst_8 = arith.constant 1.000000e+00 : f32
    %25 = vector.broadcast %cst_8 : f32 to vector<1x8xf32>
    %26 = arith.addf %25, %24 : vector<1x8xf32>
    %27 = math.log %26 : vector<1x8xf32>
    %28 = arith.addf %20, %27 : vector<1x8xf32>
    %29 = arith.select %6, %18, %28 : vector<1x8xi1>, vector<1x8xf32>
    %30 = vector.shape_cast %29 : vector<1x8xf32> to vector<1x1x8xf32>
    %cst_9 = arith.constant dense<0.000000e+00> : vector<1xf32>
    %31 = vector.multi_reduction <add>, %30, %cst_9 [1, 2] : vector<1x1x8xf32> to vector<1xf32>
    %32 = vector.shape_cast %31 : vector<1xf32> to vector<1x1x1xf32>
    %33 = vector.extract %32[0, 0, 0] : f32 from vector<1x1x1xf32>
    %cst_10 = arith.constant 8.000000e+00 : f32
    %34 = arith.divf %33, %cst_10 : f32
    %c0_11 = arith.constant 0 : index
    %35 = memref.load %arg2[%c0_11] : memref<1xf32, #tpu.memory_space<smem>>
    memref.store %34, %arg2[%c0_11] : memref<1xf32, #tpu.memory_space<smem>>
    %cst_12 = arith.constant 0.000000e+00 : f32
    %36 = vector.broadcast %cst_12 : f32 to vector<1x8xf32>
    %37 = arith.cmpf ogt, %4, %36 : vector<1x8xf32>
    %c1_i32 = arith.constant 1 : i32
    %c0_i32_13 = arith.constant 0 : i32
    %38 = vector.broadcast %c1_i32 : i32 to vector<1x8xi32>
    %39 = vector.broadcast %c0_i32_13 : i32 to vector<1x8xi32>
    %40 = arith.select %37, %38, %39 : vector<1x8xi1>, vector<1x8xi32>
    %c0_14 = arith.constant 0 : index
    %c0_15 = arith.constant 0 : index
    %41 = vector.load %arg3[%c0_14, %c0_15] : memref<1x8xi32, #tpu.memory_space<vmem>>, vector<1x8xi32>
    tpu.vector_store %arg3[%c0_14, %c0_15], %40 {strides = array<i32>} : memref<1x8xi32, #tpu.memory_space<vmem>>, vector<1x8xi32>,
    return
  }
}

</mosaic_0001>

<llo_original>
// kernel: two_stage_forward.1
$region0: #{two_stage_forward.1}
  #allocation0 [shape = 'u32[]', space=smem, size = 0x4, offset = 0x4, fixed_abs, tag = 'smem constant byte address 0x4 - core index']
  #allocation1 [shape = 'u32[144,128]{1,0:T(1,128)}', space=vmem, size = 0x12000, scoped, tag = 'internal scratch']
  %s0 = inlined_call_operand.vmem [shape: f32[2,8], index: 0, kind: input, shape index: {}]
  %s1 = inlined_call_operand.vmem [shape: s32[1,8], index: 1, kind: input, shape index: {}]
  %s2 = inlined_call_operand.hbm [shape: f32[1], index: 2, kind: output, shape index: {0}]
  %s3 = inlined_call_operand.hbm [shape: s32[1,8], index: 3, kind: output, shape index: {1}]
  %4 = xla_tuple %s2, %s3
  %s5 = sld [smem:[#allocation0]]
  $region26: #{two_stage_forward.1} parent=0
    _
  %s7 = ssub.s32 1, %s5
  %s8 = scalar_select 0, %s7, %s5
  $region1: #{two_stage_forward.1} parent=0
    #allocation2 [shape = 'u8[512]{0}', space=smem, size = 0x200, scoped, tag = 'output window, operand 0, single buffered']
    #allocation3 [shape = 's32[1]{0}', space=sflag, size = 0x4, scoped, tag = 'scoped memory for two_stage_forward.1']
    #allocation4 [shape = 's32[1]{0}', space=sflag, size = 0x4, scoped, tag = 'scoped memory for two_stage_forward.1']
    #allocation5 [shape = 'u8[512]{0}', space=vmem, size = 0x400, scoped, tag = 'output window, operand 1, single buffered']
    %9 = vsyncpa [#allocation4], 0
    %10 = vsyncpa [#allocation3], 0
    // Predicated region
    $region2: #{two_stage_forward.1} parent=1 // pred_check
      _
    $region3: #{two_stage_forward.1} parent=1 // pred_check_branch
      %12 = sbr.rel (0) target = $region5
    $region4: #{two_stage_forward.1} parent=1 // pred_region
      _
    $region5: #{two_stage_forward.1} parent=1 // pred_fallthru
      _
    // Predicated region
    $region6: #{two_stage_forward.1} parent=1 // pred_check
      _
    $region7: #{two_stage_forward.1} parent=1 // pred_check_branch
      %14 = sbr.rel (0) target = $region9
    $region8: #{two_stage_forward.1} parent=1 // pred_region
      _
    $region9: #{two_stage_forward.1} parent=1 // pred_fallthru
      _
    %v15 = vld [vmem:[%s0] sm:$0x3]
    %v16 = vld [vmem:[%s1] sm:$0x1]
    %v18 = vrot.slane %v15, 7
    %v20 = vsub.f32 %v15, %v18
    %vm21 = vcmp.ne.s32.totalorder %v16, 0
    %v22 = vsub.f32 0.0, %v20
    %v23 = vmax.f32 %v22, 0.0
    %v24 = vand.u32 2147483647, %v22
    %v25 = vsub.f32 0.0, %v24
    %v26 = vmul.f32 %v25, 1.442695
    %v27 = vpow.pop %v26
    %v28 = vadd.f32 %v27, 1.0
    %v29 = vlog2.pop %v28
    %v30 = vmul.f32 %v29, 0.6931472
    %v31 = vadd.f32 %v23, %v30
    %v32 = vmax.f32 %v20, 0.0
    %v33 = vand.u32 2147483647, %v20
    %v34 = vsub.f32 0.0, %v33
    %v35 = vmul.f32 %v34, 1.442695
    %v36 = vpow.pop %v35
    %v37 = vadd.f32 %v36, 1.0
    %v38 = vlog2.pop %v37
    %v39 = vmul.f32 %v38, 0.6931472
    %v40 = vadd.f32 %v32, %v39
    %v43 = vunpack.c.l.s4 1966171168
    %v44 = vunpack.c.0.s8 %v43
    %v45 = vlaneseq
    %v46 = vshrl.u32 %v45, 7
    %v47 = vsub.s32 %v44, %v46
    %v48 = vrot.slane %v31, %v47
    %v49 = vcombine.high %v48, %v48
    %v51 = vunpack.c.l.s4 1966171168
    %v52 = vunpack.c.0.s8 %v51
    %v53 = vlaneseq
    %v54 = vshrl.u32 %v53, 7
    %v55 = vsub.s32 %v52, %v54
    %v56 = vrot.slane %v49, %v55
    %v60 = vunpack.c.l.s4 1966171168
    %v61 = vunpack.c.0.s8 %v60
    %v62 = vlaneseq
    %v63 = vshrl.u32 %v62, 7
    %v64 = vsub.s32 %v61, %v63
    %v65 = vrot.slane %v40, %v64
    %v66 = vcombine.high %v65, %v65
    %v68 = vunpack.c.l.s4 1966171168
    %v69 = vunpack.c.0.s8 %v68
    %v70 = vlaneseq
    %v71 = vshrl.u32 %v70, 7
    %v72 = vsub.s32 %v69, %v71
    %v73 = vrot.slane %v66, %v72
    %v75 = vsel %vm21, %v56, %v73
    %vm76 = vcmask 57344
    %v77 = vsel %vm76, %v75, 0.0
    %78 = vadd.xlane.f32.xlu0 %v77
    %v79 = vpop.xlane.xlu0 %78
    %v80 = vrot.slane %v79, 4
    %v81 = vadd.f32 %v79, %v80
    %v82 = vrot.slane %v81, 2
    %v83 = vadd.f32 %v81, %v82
    %v84 = vrot.slane %v83, 1
    %v85 = vadd.f32 %v83, %v84
    %s86 = vtos %v85
    %v87 = vrcp.pop 8.0
    %s88 = vtos %v87
    %s89 = smul.f32 %s86, %s88
    %s90 = scalar_lea.smem [#allocation2], 0
    %91 = sst [smem:[%s90]] %s89
    %vm92 = vcmp.gt.f32.partialorder %v20, 0.0
    %v93 = vsel %vm92, 1, 0
    %vm94 = vcmask 58369
    %95 = vst.msk [vmem:[#allocation5 - $0x1] sm:$0x2] %vm94, %v93
    // Predicated region
    $region10: #{two_stage_forward.1} parent=1 // pred_check
      _
    $region11: #{two_stage_forward.1} parent=1 // pred_check_branch
      %97 = sbr.rel (0) target = $region13
    $region12: #{two_stage_forward.1} parent=1 // pred_region
      %s99 = ssub.s32 16, 16
      %100 = vsyncadd [#allocation4], %s99
      %103 = dma.smem_to_hbm [#allocation2], 16, %s2, [#allocation4]
    $region13: #{two_stage_forward.1} parent=1 // pred_fallthru
      _
    // Predicated region
    $region14: #{two_stage_forward.1} parent=1 // pred_check
      _
    $region15: #{two_stage_forward.1} parent=1 // pred_check_branch
      %105 = sbr.rel (0) target = $region17
    $region16: #{two_stage_forward.1} parent=1 // pred_region
      %s107 = ssub.s32 16, 16
      %108 = vsyncadd [#allocation3], %s107
      %s110 = sshll.u32 [#allocation5], 4
      %s111 = int_to_ptr.vmem [resolvable:$true] %s110
      %113 = dma.vmem_to_hbm [thread:$0]  %s111, 16, %s3, [#allocation3]
    $region17: #{two_stage_forward.1} parent=1 // pred_fallthru
      _
    // Predicated region
    $region18: #{two_stage_forward.1} parent=1 // pred_check
      _
    $region19: #{two_stage_forward.1} parent=1 // pred_check_branch
      %115 = sbr.rel (0) target = $region21
    $region20: #{two_stage_forward.1} parent=1 // pred_region
      %116 = dma.done [#allocation4], 16
    $region21: #{two_stage_forward.1} parent=1 // pred_fallthru
      _
    // Predicated region
    $region22: #{two_stage_forward.1} parent=1 // pred_check
      _
    $region23: #{two_stage_forward.1} parent=1 // pred_check_branch
      %118 = sbr.rel (0) target = $region25
    $region24: #{two_stage_forward.1} parent=1 // pred_region
      %119 = dma.done [#allocation3], 16
    $region25: #{two_stage_forward.1} parent=1 // pred_fallthru
      _
    %120 = sfence
    %121 = vsyncpa [#allocation3], 1
    %122 = vsyncpa [#allocation4], 1

</llo_original>
